<compile_context>
chip_gen: v6e
topology: v6e:2x2x1
jax: 0.10.0
libtpu: 0.0.40
codegen_flags: <defaults>
</compile_context>

<pallas_src>
import jax
import jax.numpy as jnp
from jax.experimental import pallas as pl
from jax.experimental.pallas import tpu as pltpu

IN_FEATURES = 2048
OUT_FEATURES = 4

# Lane padding: a block whose last dim < 128 still occupies 128 lanes in VMEM.
_LANE = 128
_SUBLANE = 8


def _linear_kernel(x_ref, w_ref, o_ref):
    # x_ref: (TM, 2048) VMEM tile, w_ref: (2048, 4) resident weight, o_ref: (TM, 4)
    o_ref[...] = jnp.dot(
        x_ref[...], w_ref[...], preferred_element_type=jnp.float32
    ).astype(o_ref.dtype)


def _round_up(v, m):
    return ((v + m - 1) // m) * m


def predictor_yololike_forward(x, w_t, *, tm=512):
    """x: (..., 2048), w_t: (2048, 4) (already-transposed nn.Linear weight)."""
    orig_shape = x.shape
    assert orig_shape[-1] == IN_FEATURES
    x2d = x.reshape(-1, IN_FEATURES)
    m = x2d.shape[0]

    # Effective row tile: at most `tm`, at least 8, multiple of 8, no bigger than
    # the (sublane-rounded) problem size.
    tm_eff = min(max(tm, _SUBLANE), _round_up(max(m, 1), _SUBLANE))
    tm_eff = _round_up(tm_eff, _SUBLANE)

    # Pad flattened batch up to a multiple of the tile (sliced off at the end).
    m_pad = _round_up(m, tm_eff)
    if m_pad != m:
        x2d = jnp.pad(x2d, ((0, m_pad - m), (0, 0)))

    x_itemsize = jnp.dtype(x2d.dtype).itemsize
    w_itemsize = jnp.dtype(w_t.dtype).itemsize
    o_itemsize = jnp.dtype(x.dtype).itemsize

    # Live-VMEM estimate (double-buffered x, resident lane-padded weight,
    # double-buffered lane-padded output) + headroom.
    vmem_est = (
        2 * tm_eff * IN_FEATURES * x_itemsize
        + 2 * IN_FEATURES * _LANE * w_itemsize
        + 2 * tm_eff * _LANE * o_itemsize
    )
    vmem_limit = None
    if vmem_est > (24 << 20):
        # Raise scoped VMEM only when needed; cap at 64 MiB so it's valid on v7x.
        vmem_limit = min(int(vmem_est * 1.5), 64 << 20)

    cost = pl.CostEstimate(
        flops=2 * m_pad * IN_FEATURES * OUT_FEATURES,
        transcendentals=0,
        bytes_accessed=(
            m_pad * IN_FEATURES * x_itemsize
            + IN_FEATURES * OUT_FEATURES * w_itemsize
            + m_pad * OUT_FEATURES * o_itemsize
        ),
    )

    out2d = pl.pallas_call(
        _linear_kernel,
        out_shape=jax.ShapeDtypeStruct((m_pad, OUT_FEATURES), x.dtype),
        grid_spec=pltpu.PrefetchScalarGridSpec(
            num_scalar_prefetch=0,
            grid=(m_pad // tm_eff,),
            in_specs=[
                pl.BlockSpec((tm_eff, IN_FEATURES), lambda i: (i, 0)),
                # Constant block index -> weight stays resident in VMEM across steps.
                pl.BlockSpec((IN_FEATURES, OUT_FEATURES), lambda i: (0, 0)),
            ],
            out_specs=pl.BlockSpec((tm_eff, OUT_FEATURES), lambda i: (i, 0)),
        ),
        compiler_params=pltpu.CompilerParams(
            dimension_semantics=("parallel",),
            vmem_limit_bytes=vmem_limit,
        ),
        cost_estimate=cost,
    )(x2d, w_t)

    if m_pad != m:
        out2d = out2d[:m]
    return out2d.reshape(*orig_shape[:-1], OUT_FEATURES)


def init_params(key):
    # Deterministic init mimicking nn.Linear default (kaiming-uniform bound).
    bound = 1.0 / jnp.sqrt(jnp.float32(IN_FEATURES))
    w = jax.random.uniform(
        key, (OUT_FEATURES, IN_FEATURES), dtype=jnp.float32,
        minval=-bound, maxval=bound,
    )
    return w


if __name__ == "__main__":
    key = jax.random.PRNGKey(0)
    k_x, k_w, k_x2 = jax.random.split(key, 3)

    w = init_params(k_w)   # (4, 2048), as in nn.Linear.weight
    w_t = w.T               # (2048, 4) for the kernel

    # Small input consistent with the module: (batch=2, seq=8, features=2048) -> M=16
    x = jax.random.normal(k_x, (2, 8, IN_FEATURES), dtype=jnp.float32)
    out = predictor_yololike_forward(x, w_t)
    out = jax.block_until_ready(out)

    ref = jnp.einsum("bsf,of->bso", x, w)
    assert out.shape == (2, 8, OUT_FEATURES)
    assert jnp.allclose(out, ref, atol=1e-4, rtol=1e-4)

    # Ragged-M case (M=15, not a multiple of 8) exercises the padding path.
    x2 = jax.random.normal(k_x2, (3, 5, IN_FEATURES), dtype=jnp.float32)
    out2 = jax.block_until_ready(predictor_yololike_forward(x2, w_t))
    ref2 = jnp.einsum("bsf,of->bso", x2, w)
    assert out2.shape == (3, 5, OUT_FEATURES)
    assert jnp.allclose(out2, ref2, atol=1e-4, rtol=1e-4)

    print("KERNEL_OK")
</pallas_src>

<mosaic_0001>
module attributes {stable_mosaic.version = 11 : i64} {
  func.func @_linear_kernel(%arg0: i32, %arg1: memref<16x2048xf32, #tpu.memory_space<vmem>>, %arg2: memref<2048x4xf32, #tpu.memory_space<vmem>>, %arg3: memref<16x4xf32, #tpu.memory_space<vmem>>) attributes {dimension_semantics = [#tpu.dimension_semantics<parallel>], iteration_bounds = array<i64: 1>, scalar_prefetch = 0 : i64, scratch_operands = 0 : i64, tpu.core_type = #tpu.core_type<tc>, window_params = [{transform_indices = @transform_0, window_bounds = array<i64: 16, 2048>}, {pipeline_mode = #tpu.pipeline_mode<synchronous>, transform_indices = @transform_1, window_bounds = array<i64: 2048, 4>}, {transform_indices = @transform_2, window_bounds = array<i64: 16, 4>}]} {
    %c0 = arith.constant 0 : index
    %c0_0 = arith.constant 0 : index
    %0 = vector.load %arg1[%c0, %c0_0] : memref<16x2048xf32, #tpu.memory_space<vmem>>, vector<16x2048xf32>
    %c0_1 = arith.constant 0 : index
    %c0_2 = arith.constant 0 : index
    %1 = vector.load %arg2[%c0_1, %c0_2] : memref<2048x4xf32, #tpu.memory_space<vmem>>, vector<2048x4xf32>
    %cst = arith.constant dense<0.000000e+00> : vector<16x4xf32>
    %2 = tpu.matmul %0, %1, %cst {dimension_numbers = #tpu.dot_dimension_numbers<[1], [0], [0], [1], [0, 0, 1, 1], [], []>} : vector<16x2048xf32>, vector<2048x4xf32>, vector<16x4xf32> -> vector<16x4xf32>
    %c0_3 = arith.constant 0 : index
    %c0_4 = arith.constant 0 : index
    %3 = vector.load %arg3[%c0_3, %c0_4] : memref<16x4xf32, #tpu.memory_space<vmem>>, vector<16x4xf32>
    tpu.vector_store %arg3[%c0_3, %c0_4], %2 {strides = array<i32>} : memref<16x4xf32, #tpu.memory_space<vmem>>, vector<16x4xf32>,
    return
  }
  func.func @transform_0(%arg0: i32) -> (i32, i32) {
    %c0_i32 = arith.constant 0 : i32
    %c0_i32_0 = arith.constant 0 : i32
    return %arg0, %c0_i32 : i32, i32
  }
  func.func @transform_1(%arg0: i32) -> (i32, i32) {
    %c0_i32 = arith.constant 0 : i32
    %c0_i32_0 = arith.constant 0 : i32
    %c0_i32_1 = arith.constant 0 : i32
    return %c0_i32, %c0_i32_0 : i32, i32
  }
  func.func @transform_2(%arg0: i32) -> (i32, i32) {
    %c0_i32 = arith.constant 0 : i32
    %c0_i32_0 = arith.constant 0 : i32
    return %arg0, %c0_i32 : i32, i32
  }
}

</mosaic_0001>

<llo_original>
// kernel: tpu_custom_call.1
$region0: #{tpu_custom_call.1}
  #allocation0 [shape = 'u32[]', space=smem, size = 0x4, offset = 0x4, fixed_abs, tag = 'smem constant byte address 0x4 - core index']
  #allocation1 [shape = 'u32[144,128]{1,0:T(1,128)}', space=vmem, size = 0x12000, scoped, tag = 'internal scratch']
  %s0 = inlined_call_operand.vmem [shape: f32[16,2048], index: 0, kind: input, shape index: {}]
  %s1 = inlined_call_operand.vmem [shape: f32[2048,4], index: 1, kind: input, shape index: {}]
  %s2 = inlined_call_operand.vmem [shape: f32[16,4], index: 2, kind: output, shape index: {}]
  %s3 = sld [smem:[#allocation0]]
  $region18: #{tpu_custom_call.1} parent=0
    _
  %s5 = ssub.s32 1, %s3
  %s6 = scalar_select 0, %s5, %s3
  // Predicated region
  $region2: #{tpu_custom_call.1} parent=0 // pred_check
    _
  $region3: #{tpu_custom_call.1} parent=0 // pred_check_branch
    %8 = sbr.rel (0) target = $region5
  $region4: #{tpu_custom_call.1} parent=0 // pred_region
    _
  $region5: #{tpu_custom_call.1} parent=0 // pred_fallthru
    _
  // Predicated region
  $region6: #{tpu_custom_call.1} parent=0 // pred_check
    _
  $region7: #{tpu_custom_call.1} parent=0 // pred_check_branch
    %10 = sbr.rel (0) target = $region9
  $region8: #{tpu_custom_call.1} parent=0 // pred_region
    _
  $region9: #{tpu_custom_call.1} parent=0 // pred_fallthru
    _
  %v11 = vld [vmem:[%s0] sm:$0xff]
  %v12 = vld [vmem:[%s0 + $0x8] sm:$0xff]
  %v13 = vld [vmem:[%s0 + $0x10] sm:$0xff]
  %v14 = vld [vmem:[%s0 + $0x18] sm:$0xff]
  %v15 = vld [vmem:[%s0 + $0x20] sm:$0xff]
  %v16 = vld [vmem:[%s0 + $0x28] sm:$0xff]
  %v17 = vld [vmem:[%s0 + $0x30] sm:$0xff]
  %v18 = vld [vmem:[%s0 + $0x38] sm:$0xff]
  %v19 = vld [vmem:[%s0 + $0x40] sm:$0xff]
  %v20 = vld [vmem:[%s0 + $0x48] sm:$0xff]
  %v21 = vld [vmem:[%s0 + $0x50] sm:$0xff]
  %v22 = vld [vmem:[%s0 + $0x58] sm:$0xff]
  %v23 = vld [vmem:[%s0 + $0x60] sm:$0xff]
  %v24 = vld [vmem:[%s0 + $0x68] sm:$0xff]
  %v25 = vld [vmem:[%s0 + $0x70] sm:$0xff]
  %v26 = vld [vmem:[%s0 + $0x78] sm:$0xff]
  %v27 = vld [vmem:[%s0 + $0x80] sm:$0xff]
  %v28 = vld [vmem:[%s0 + $0x88] sm:$0xff]
  %v29 = vld [vmem:[%s0 + $0x90] sm:$0xff]
  %v30 = vld [vmem:[%s0 + $0x98] sm:$0xff]
  %v31 = vld [vmem:[%s0 + $0xa0] sm:$0xff]
  %v32 = vld [vmem:[%s0 + $0xa8] sm:$0xff]
  %v33 = vld [vmem:[%s0 + $0xb0] sm:$0xff]
  %v34 = vld [vmem:[%s0 + $0xb8] sm:$0xff]
  %v35 = vld [vmem:[%s0 + $0xc0] sm:$0xff]
  %v36 = vld [vmem:[%s0 + $0xc8] sm:$0xff]
  %v37 = vld [vmem:[%s0 + $0xd0] sm:$0xff]
  %v38 = vld [vmem:[%s0 + $0xd8] sm:$0xff]
  %v39 = vld [vmem:[%s0 + $0xe0] sm:$0xff]
  %v40 = vld [vmem:[%s0 + $0xe8] sm:$0xff]
  %v41 = vld [vmem:[%s0 + $0xf0] sm:$0xff]
  %v42 = vld [vmem:[%s0 + $0xf8] sm:$0xff]
  %v43 = vld [vmem:[%s1] sm:$0xff]
  %v44 = vld [vmem:[%s1 + $0x8] sm:$0xff]
  %v45 = vld [vmem:[%s1 + $0x10] sm:$0xff]
  %v46 = vld [vmem:[%s1 + $0x18] sm:$0xff]
  %v47 = vld [vmem:[%s1 + $0x20] sm:$0xff]
  %v48 = vld [vmem:[%s1 + $0x28] sm:$0xff]
  %v49 = vld [vmem:[%s1 + $0x30] sm:$0xff]
  %v50 = vld [vmem:[%s1 + $0x38] sm:$0xff]
  %v51 = vld [vmem:[%s1 + $0x40] sm:$0xff]
  %v52 = vld [vmem:[%s1 + $0x48] sm:$0xff]
  %v53 = vld [vmem:[%s1 + $0x50] sm:$0xff]
  %v54 = vld [vmem:[%s1 + $0x58] sm:$0xff]
  %v55 = vld [vmem:[%s1 + $0x60] sm:$0xff]
  %v56 = vld [vmem:[%s1 + $0x68] sm:$0xff]
  %v57 = vld [vmem:[%s1 + $0x70] sm:$0xff]
  %v58 = vld [vmem:[%s1 + $0x78] sm:$0xff]
  %v59 = vld [vmem:[%s1 + $0x80] sm:$0xff]
  %v60 = vld [vmem:[%s1 + $0x88] sm:$0xff]
  %v61 = vld [vmem:[%s1 + $0x90] sm:$0xff]
  %v62 = vld [vmem:[%s1 + $0x98] sm:$0xff]
  %v63 = vld [vmem:[%s1 + $0xa0] sm:$0xff]
  %v64 = vld [vmem:[%s1 + $0xa8] sm:$0xff]
  %v65 = vld [vmem:[%s1 + $0xb0] sm:$0xff]
  %v66 = vld [vmem:[%s1 + $0xb8] sm:$0xff]
  %v67 = vld [vmem:[%s1 + $0xc0] sm:$0xff]
  %v68 = vld [vmem:[%s1 + $0xc8] sm:$0xff]
  %v69 = vld [vmem:[%s1 + $0xd0] sm:$0xff]
  %v70 = vld [vmem:[%s1 + $0xd8] sm:$0xff]
  %v71 = vld [vmem:[%s1 + $0xe0] sm:$0xff]
  %v72 = vld [vmem:[%s1 + $0xe8] sm:$0xff]
  %v73 = vld [vmem:[%s1 + $0xf0] sm:$0xff]
  %v74 = vld [vmem:[%s1 + $0xf8] sm:$0xff]
  %v75 = vld [vmem:[%s1 + $0x100] sm:$0xff]
  %v76 = vld [vmem:[%s1 + $0x108] sm:$0xff]
  %v77 = vld [vmem:[%s1 + $0x110] sm:$0xff]
  %v78 = vld [vmem:[%s1 + $0x118] sm:$0xff]
  %v79 = vld [vmem:[%s1 + $0x120] sm:$0xff]
  %v80 = vld [vmem:[%s1 + $0x128] sm:$0xff]
  %v81 = vld [vmem:[%s1 + $0x130] sm:$0xff]
  %v82 = vld [vmem:[%s1 + $0x138] sm:$0xff]
  %v83 = vld [vmem:[%s1 + $0x140] sm:$0xff]
  %v84 = vld [vmem:[%s1 + $0x148] sm:$0xff]
  %v85 = vld [vmem:[%s1 + $0x150] sm:$0xff]
  %v86 = vld [vmem:[%s1 + $0x158] sm:$0xff]
  %v87 = vld [vmem:[%s1 + $0x160] sm:$0xff]
  %v88 = vld [vmem:[%s1 + $0x168] sm:$0xff]
  %v89 = vld [vmem:[%s1 + $0x170] sm:$0xff]
  %v90 = vld [vmem:[%s1 + $0x178] sm:$0xff]
  %v91 = vld [vmem:[%s1 + $0x180] sm:$0xff]
  %v92 = vld [vmem:[%s1 + $0x188] sm:$0xff]
  %v93 = vld [vmem:[%s1 + $0x190] sm:$0xff]
  %v94 = vld [vmem:[%s1 + $0x198] sm:$0xff]
  %v95 = vld [vmem:[%s1 + $0x1a0] sm:$0xff]
  %v96 = vld [vmem:[%s1 + $0x1a8] sm:$0xff]
  %v97 = vld [vmem:[%s1 + $0x1b0] sm:$0xff]
  %v98 = vld [vmem:[%s1 + $0x1b8] sm:$0xff]
  %v99 = vld [vmem:[%s1 + $0x1c0] sm:$0xff]
  %v100 = vld [vmem:[%s1 + $0x1c8] sm:$0xff]
  %v101 = vld [vmem:[%s1 + $0x1d0] sm:$0xff]
  %v102 = vld [vmem:[%s1 + $0x1d8] sm:$0xff]
  %v103 = vld [vmem:[%s1 + $0x1e0] sm:$0xff]
  %v104 = vld [vmem:[%s1 + $0x1e8] sm:$0xff]
  %v105 = vld [vmem:[%s1 + $0x1f0] sm:$0xff]
  %v106 = vld [vmem:[%s1 + $0x1f8] sm:$0xff]
  %v107 = vld [vmem:[%s1 + $0x200] sm:$0xff]
  %v108 = vld [vmem:[%s1 + $0x208] sm:$0xff]
  %v109 = vld [vmem:[%s1 + $0x210] sm:$0xff]
  %v110 = vld [vmem:[%s1 + $0x218] sm:$0xff]
  %v111 = vld [vmem:[%s1 + $0x220] sm:$0xff]
  %v112 = vld [vmem:[%s1 + $0x228] sm:$0xff]
  %v113 = vld [vmem:[%s1 + $0x230] sm:$0xff]
  %v114 = vld [vmem:[%s1 + $0x238] sm:$0xff]
  %v115 = vld [vmem:[%s1 + $0x240] sm:$0xff]
  %v116 = vld [vmem:[%s1 + $0x248] sm:$0xff]
  %v117 = vld [vmem:[%s1 + $0x250] sm:$0xff]
  %v118 = vld [vmem:[%s1 + $0x258] sm:$0xff]
  %v119 = vld [vmem:[%s1 + $0x260] sm:$0xff]
  %v120 = vld [vmem:[%s1 + $0x268] sm:$0xff]
  %v121 = vld [vmem:[%s1 + $0x270] sm:$0xff]
  %v122 = vld [vmem:[%s1 + $0x278] sm:$0xff]
  %v123 = vld [vmem:[%s1 + $0x280] sm:$0xff]
  %v124 = vld [vmem:[%s1 + $0x288] sm:$0xff]
  %v125 = vld [vmem:[%s1 + $0x290] sm:$0xff]
  %v126 = vld [vmem:[%s1 + $0x298] sm:$0xff]
  %v127 = vld [vmem:[%s1 + $0x2a0] sm:$0xff]
  %v128 = vld [vmem:[%s1 + $0x2a8] sm:$0xff]
  %v129 = vld [vmem:[%s1 + $0x2b0] sm:$0xff]
  %v130 = vld [vmem:[%s1 + $0x2b8] sm:$0xff]
  %v131 = vld [vmem:[%s1 + $0x2c0] sm:$0xff]
  %v132 = vld [vmem:[%s1 + $0x2c8] sm:$0xff]
  %v133 = vld [vmem:[%s1 + $0x2d0] sm:$0xff]
  %v134 = vld [vmem:[%s1 + $0x2d8] sm:$0xff]
  %v135 = vld [vmem:[%s1 + $0x2e0] sm:$0xff]
  %v136 = vld [vmem:[%s1 + $0x2e8] sm:$0xff]
  %v137 = vld [vmem:[%s1 + $0x2f0] sm:$0xff]
  %v138 = vld [vmem:[%s1 + $0x2f8] sm:$0xff]
  %v139 = vld [vmem:[%s1 + $0x300] sm:$0xff]
  %v140 = vld [vmem:[%s1 + $0x308] sm:$0xff]
  %v141 = vld [vmem:[%s1 + $0x310] sm:$0xff]
  %v142 = vld [vmem:[%s1 + $0x318] sm:$0xff]
  %v143 = vld [vmem:[%s1 + $0x320] sm:$0xff]
  %v144 = vld [vmem:[%s1 + $0x328] sm:$0xff]
  %v145 = vld [vmem:[%s1 + $0x330] sm:$0xff]
  %v146 = vld [vmem:[%s1 + $0x338] sm:$0xff]
  %v147 = vld [vmem:[%s1 + $0x340] sm:$0xff]
  %v148 = vld [vmem:[%s1 + $0x348] sm:$0xff]
  %v149 = vld [vmem:[%s1 + $0x350] sm:$0xff]
  %v150 = vld [vmem:[%s1 + $0x358] sm:$0xff]
  %v151 = vld [vmem:[%s1 + $0x360] sm:$0xff]
  %v152 = vld [vmem:[%s1 + $0x368] sm:$0xff]
  %v153 = vld [vmem:[%s1 + $0x370] sm:$0xff]
  %v154 = vld [vmem:[%s1 + $0x378] sm:$0xff]
  %v155 = vld [vmem:[%s1 + $0x380] sm:$0xff]
  %v156 = vld [vmem:[%s1 + $0x388] sm:$0xff]
  %v157 = vld [vmem:[%s1 + $0x390] sm:$0xff]
  %v158 = vld [vmem:[%s1 + $0x398] sm:$0xff]
  %v159 = vld [vmem:[%s1 + $0x3a0] sm:$0xff]
  %v160 = vld [vmem:[%s1 + $0x3a8] sm:$0xff]
  %v161 = vld [vmem:[%s1 + $0x3b0] sm:$0xff]
  %v162 = vld [vmem:[%s1 + $0x3b8] sm:$0xff]
  %v163 = vld [vmem:[%s1 + $0x3c0] sm:$0xff]
  %v164 = vld [vmem:[%s1 + $0x3c8] sm:$0xff]
  %v165 = vld [vmem:[%s1 + $0x3d0] sm:$0xff]
  %v166 = vld [vmem:[%s1 + $0x3d8] sm:$0xff]
  %v167 = vld [vmem:[%s1 + $0x3e0] sm:$0xff]
  %v168 = vld [vmem:[%s1 + $0x3e8] sm:$0xff]
  %v169 = vld [vmem:[%s1 + $0x3f0] sm:$0xff]
  %v170 = vld [vmem:[%s1 + $0x3f8] sm:$0xff]
  %v171 = vld [vmem:[%s1 + $0x400] sm:$0xff]
  %v172 = vld [vmem:[%s1 + $0x408] sm:$0xff]
  %v173 = vld [vmem:[%s1 + $0x410] sm:$0xff]
  %v174 = vld [vmem:[%s1 + $0x418] sm:$0xff]
  %v175 = vld [vmem:[%s1 + $0x420] sm:$0xff]
  %v176 = vld [vmem:[%s1 + $0x428] sm:$0xff]
  %v177 = vld [vmem:[%s1 + $0x430] sm:$0xff]
  %v178 = vld [vmem:[%s1 + $0x438] sm:$0xff]
  %v179 = vld [vmem:[%s1 + $0x440] sm:$0xff]
  %v180 = vld [vmem:[%s1 + $0x448] sm:$0xff]
  %v181 = vld [vmem:[%s1 + $0x450] sm:$0xff]
  %v182 = vld [vmem:[%s1 + $0x458] sm:$0xff]
  %v183 = vld [vmem:[%s1 + $0x460] sm:$0xff]
  %v184 = vld [vmem:[%s1 + $0x468] sm:$0xff]
  %v185 = vld [vmem:[%s1 + $0x470] sm:$0xff]
  %v186 = vld [vmem:[%s1 + $0x478] sm:$0xff]
  %v187 = vld [vmem:[%s1 + $0x480] sm:$0xff]
  %v188 = vld [vmem:[%s1 + $0x488] sm:$0xff]
  %v189 = vld [vmem:[%s1 + $0x490] sm:$0xff]
  %v190 = vld [vmem:[%s1 + $0x498] sm:$0xff]
  %v191 = vld [vmem:[%s1 + $0x4a0] sm:$0xff]
  %v192 = vld [vmem:[%s1 + $0x4a8] sm:$0xff]
  %v193 = vld [vmem:[%s1 + $0x4b0] sm:$0xff]
  %v194 = vld [vmem:[%s1 + $0x4b8] sm:$0xff]
  %v195 = vld [vmem:[%s1 + $0x4c0] sm:$0xff]
  %v196 = vld [vmem:[%s1 + $0x4c8] sm:$0xff]
  %v197 = vld [vmem:[%s1 + $0x4d0] sm:$0xff]
  %v198 = vld [vmem:[%s1 + $0x4d8] sm:$0xff]
  %v199 = vld [vmem:[%s1 + $0x4e0] sm:$0xff]
  %v200 = vld [vmem:[%s1 + $0x4e8] sm:$0xff]
  %v201 = vld [vmem:[%s1 + $0x4f0] sm:$0xff]
  %v202 = vld [vmem:[%s1 + $0x4f8] sm:$0xff]
  %v203 = vld [vmem:[%s1 + $0x500] sm:$0xff]
  %v204 = vld [vmem:[%s1 + $0x508] sm:$0xff]
  %v205 = vld [vmem:[%s1 + $0x510] sm:$0xff]
  %v206 = vld [vmem:[%s1 + $0x518] sm:$0xff]
  %v207 = vld [vmem:[%s1 + $0x520] sm:$0xff]
  %v208 = vld [vmem:[%s1 + $0x528] sm:$0xff]
  %v209 = vld [vmem:[%s1 + $0x530] sm:$0xff]
  %v210 = vld [vmem:[%s1 + $0x538] sm:$0xff]
  %v211 = vld [vmem:[%s1 + $0x540] sm:$0xff]
  %v212 = vld [vmem:[%s1 + $0x548] sm:$0xff]
  %v213 = vld [vmem:[%s1 + $0x550] sm:$0xff]
  %v214 = vld [vmem:[%s1 + $0x558] sm:$0xff]
  %v215 = vld [vmem:[%s1 + $0x560] sm:$0xff]
  %v216 = vld [vmem:[%s1 + $0x568] sm:$0xff]
  %v217 = vld [vmem:[%s1 + $0x570] sm:$0xff]
  %v218 = vld [vmem:[%s1 + $0x578] sm:$0xff]
  %v219 = vld [vmem:[%s1 + $0x580] sm:$0xff]
  %v220 = vld [vmem:[%s1 + $0x588] sm:$0xff]
  %v221 = vld [vmem:[%s1 + $0x590] sm:$0xff]
  %v222 = vld [vmem:[%s1 + $0x598] sm:$0xff]
  %v223 = vld [vmem:[%s1 + $0x5a0] sm:$0xff]
  %v224 = vld [vmem:[%s1 + $0x5a8] sm:$0xff]
  %v225 = vld [vmem:[%s1 + $0x5b0] sm:$0xff]
  %v226 = vld [vmem:[%s1 + $0x5b8] sm:$0xff]
  %v227 = vld [vmem:[%s1 + $0x5c0] sm:$0xff]
  %v228 = vld [vmem:[%s1 + $0x5c8] sm:$0xff]
  %v229 = vld [vmem:[%s1 + $0x5d0] sm:$0xff]
  %v230 = vld [vmem:[%s1 + $0x5d8] sm:$0xff]
  %v231 = vld [vmem:[%s1 + $0x5e0] sm:$0xff]
  %v232 = vld [vmem:[%s1 + $0x5e8] sm:$0xff]
  %v233 = vld [vmem:[%s1 + $0x5f0] sm:$0xff]
  %v234 = vld [vmem:[%s1 + $0x5f8] sm:$0xff]
  %v235 = vld [vmem:[%s1 + $0x600] sm:$0xff]
  %v236 = vld [vmem:[%s1 + $0x608] sm:$0xff]
  %v237 = vld [vmem:[%s1 + $0x610] sm:$0xff]
  %v238 = vld [vmem:[%s1 + $0x618] sm:$0xff]
  %v239 = vld [vmem:[%s1 + $0x620] sm:$0xff]
  %v240 = vld [vmem:[%s1 + $0x628] sm:$0xff]
  %v241 = vld [vmem:[%s1 + $0x630] sm:$0xff]
  %v242 = vld [vmem:[%s1 + $0x638] sm:$0xff]
  %v243 = vld [vmem:[%s1 + $0x640] sm:$0xff]
  %v244 = vld [vmem:[%s1 + $0x648] sm:$0xff]
  %v245 = vld [vmem:[%s1 + $0x650] sm:$0xff]
  %v246 = vld [vmem:[%s1 + $0x658] sm:$0xff]
  %v247 = vld [vmem:[%s1 + $0x660] sm:$0xff]
  %v248 = vld [vmem:[%s1 + $0x668] sm:$0xff]
  %v249 = vld [vmem:[%s1 + $0x670] sm:$0xff]
  %v250 = vld [vmem:[%s1 + $0x678] sm:$0xff]
  %v251 = vld [vmem:[%s1 + $0x680] sm:$0xff]
  %v252 = vld [vmem:[%s1 + $0x688] sm:$0xff]
  %v253 = vld [vmem:[%s1 + $0x690] sm:$0xff]
  %v254 = vld [vmem:[%s1 + $0x698] sm:$0xff]
  %v255 = vld [vmem:[%s1 + $0x6a0] sm:$0xff]
  %v256 = vld [vmem:[%s1 + $0x6a8] sm:$0xff]
  %v257 = vld [vmem:[%s1 + $0x6b0] sm:$0xff]
  %v258 = vld [vmem:[%s1 + $0x6b8] sm:$0xff]
  %v259 = vld [vmem:[%s1 + $0x6c0] sm:$0xff]
  %v260 = vld [vmem:[%s1 + $0x6c8] sm:$0xff]
  %v261 = vld [vmem:[%s1 + $0x6d0] sm:$0xff]
  %v262 = vld [vmem:[%s1 + $0x6d8] sm:$0xff]
  %v263 = vld [vmem:[%s1 + $0x6e0] sm:$0xff]
  %v264 = vld [vmem:[%s1 + $0x6e8] sm:$0xff]
  %v265 = vld [vmem:[%s1 + $0x6f0] sm:$0xff]
  %v266 = vld [vmem:[%s1 + $0x6f8] sm:$0xff]
  %v267 = vld [vmem:[%s1 + $0x700] sm:$0xff]
  %v268 = vld [vmem:[%s1 + $0x708] sm:$0xff]
  %v269 = vld [vmem:[%s1 + $0x710] sm:$0xff]
  %v270 = vld [vmem:[%s1 + $0x718] sm:$0xff]
  %v271 = vld [vmem:[%s1 + $0x720] sm:$0xff]
  %v272 = vld [vmem:[%s1 + $0x728] sm:$0xff]
  %v273 = vld [vmem:[%s1 + $0x730] sm:$0xff]
  %v274 = vld [vmem:[%s1 + $0x738] sm:$0xff]
  %v275 = vld [vmem:[%s1 + $0x740] sm:$0xff]
  %v276 = vld [vmem:[%s1 + $0x748] sm:$0xff]
  %v277 = vld [vmem:[%s1 + $0x750] sm:$0xff]
  %v278 = vld [vmem:[%s1 + $0x758] sm:$0xff]
  %v279 = vld [vmem:[%s1 + $0x760] sm:$0xff]
  %v280 = vld [vmem:[%s1 + $0x768] sm:$0xff]
  %v281 = vld [vmem:[%s1 + $0x770] sm:$0xff]
  %v282 = vld [vmem:[%s1 + $0x778] sm:$0xff]
  %v283 = vld [vmem:[%s1 + $0x780] sm:$0xff]
  %v284 = vld [vmem:[%s1 + $0x788] sm:$0xff]
  %v285 = vld [vmem:[%s1 + $0x790] sm:$0xff]
  %v286 = vld [vmem:[%s1 + $0x798] sm:$0xff]
  %v287 = vld [vmem:[%s1 + $0x7a0] sm:$0xff]
  %v288 = vld [vmem:[%s1 + $0x7a8] sm:$0xff]
  %v289 = vld [vmem:[%s1 + $0x7b0] sm:$0xff]
  %v290 = vld [vmem:[%s1 + $0x7b8] sm:$0xff]
  %v291 = vld [vmem:[%s1 + $0x7c0] sm:$0xff]
  %v292 = vld [vmem:[%s1 + $0x7c8] sm:$0xff]
  %v293 = vld [vmem:[%s1 + $0x7d0] sm:$0xff]
  %v294 = vld [vmem:[%s1 + $0x7d8] sm:$0xff]
  %v295 = vld [vmem:[%s1 + $0x7e0] sm:$0xff]
  %v296 = vld [vmem:[%s1 + $0x7e8] sm:$0xff]
  %v297 = vld [vmem:[%s1 + $0x7f0] sm:$0xff]
  %v298 = vld [vmem:[%s1 + $0x7f8] sm:$0xff]
  %299 = vmatprep.subr.mxu0 0.0
  %300 = vmatpush1.msra.mxu0 %v58
  %301 = vmatprep.subr.mxu0 0.0
  %302 = vmatpush1.msra.mxu0 %v57
  %303 = vmatprep.subr.mxu0 0.0
  %304 = vmatpush1.msra.mxu0 %v56
  %305 = vmatprep.subr.mxu0 0.0
  %306 = vmatpush1.msra.mxu0 %v55
  %307 = vmatprep.subr.mxu0 0.0
  %308 = vmatpush1.msra.mxu0 %v54
  %309 = vmatprep.subr.mxu0 0.0
  %310 = vmatpush1.msra.mxu0 %v53
  %311 = vmatprep.subr.mxu0 0.0
  %312 = vmatpush1.msra.mxu0 %v52
  %313 = vmatprep.subr.mxu0 0.0
  %314 = vmatpush1.msra.mxu0 %v51
  %315 = vmatprep.subr.mxu0 0.0
  %316 = vmatpush1.msra.mxu0 %v50
  %317 = vmatprep.subr.mxu0 0.0
  %318 = vmatpush1.msra.mxu0 %v49
  %319 = vmatprep.subr.mxu0 0.0
  %320 = vmatpush1.msra.mxu0 %v48
  %321 = vmatprep.subr.mxu0 0.0
  %322 = vmatpush1.msra.mxu0 %v47
  %323 = vmatprep.subr.mxu0 0.0
  %324 = vmatpush1.msra.mxu0 %v46
  %325 = vmatprep.subr.mxu0 0.0
  %326 = vmatpush1.msra.mxu0 %v45
  %327 = vmatprep.subr.mxu0 0.0
  %328 = vmatpush1.msra.mxu0 %v44
  %329 = vmatprep.subr.mxu0 0.0
  %330 = vmatpush1.msra.mxu0 %v43
  %331 = vmatprep.subr.mxu0 0.0
  %332 = vmatpush2.msra.mxu0 %v74
  %333 = vmatprep.subr.mxu0 0.0
  %334 = vmatpush2.msra.mxu0 %v73
  %335 = vmatprep.subr.mxu0 0.0
  %336 = vmatpush2.msra.mxu0 %v72
  %337 = vmatprep.subr.mxu0 0.0
  %338 = vmatpush2.msra.mxu0 %v71
  %339 = vmatprep.subr.mxu0 0.0
  %340 = vmatpush2.msra.mxu0 %v70
  %341 = vmatprep.subr.mxu0 0.0
  %342 = vmatpush2.msra.mxu0 %v69
  %343 = vmatprep.subr.mxu0 0.0
  %344 = vmatpush2.msra.mxu0 %v68
  %345 = vmatprep.subr.mxu0 0.0
  %346 = vmatpush2.msra.mxu0 %v67
  %347 = vmatprep.subr.mxu0 0.0
  %348 = vmatpush2.msra.mxu0 %v66
  %349 = vmatprep.subr.mxu0 0.0
  %350 = vmatpush2.msra.mxu0 %v65
  %351 = vmatprep.subr.mxu0 0.0
  %352 = vmatpush2.msra.mxu0 %v64
  %353 = vmatprep.subr.mxu0 0.0
  %354 = vmatpush2.msra.mxu0 %v63
  %355 = vmatprep.subr.mxu0 0.0
  %356 = vmatpush2.msra.mxu0 %v62
  %357 = vmatprep.subr.mxu0 0.0
  %358 = vmatpush2.msra.mxu0 %v61
  %359 = vmatprep.subr.mxu0 0.0
  %360 = vmatpush2.msra.mxu0 %v60
  %361 = vmatprep.subr.mxu0 0.0
  %362 = vmatpush2.msra.mxu0 %v59
  %363 = vmatprep.mubr.f32.mxu0 %v12
  %364 = vmatmul.mubr.f32.gmra.mxu0 %v11
  %v365 = vpop.f32.mrf.mxu0
  %v366 = vadd.f32 0.0, %v365
  %v367 = vpop.f32.mrf.mxu0
  %368 = vmatprep.mubr.f32.mxu0 %v28
  %369 = vmatmul.mubr.f32.gmra.mxu0 %v27
  %v370 = vpop.f32.mrf.mxu0
  %v371 = vadd.f32 0.0, %v370
  %v372 = vpop.f32.mrf.mxu0
  %373 = vdwg.mxu0
  %374 = vmatprep.subr.mxu0 0.0
  %375 = vmatpush1.msra.mxu0 %v90
  %376 = vmatprep.subr.mxu0 0.0
  %377 = vmatpush1.msra.mxu0 %v89
  %378 = vmatprep.subr.mxu0 0.0
  %379 = vmatpush1.msra.mxu0 %v88
  %380 = vmatprep.subr.mxu0 0.0
  %381 = vmatpush1.msra.mxu0 %v87
  %382 = vmatprep.subr.mxu0 0.0
  %383 = vmatpush1.msra.mxu0 %v86
  %384 = vmatprep.subr.mxu0 0.0
  %385 = vmatpush1.msra.mxu0 %v85
  %386 = vmatprep.subr.mxu0 0.0
  %387 = vmatpush1.msra.mxu0 %v84
  %388 = vmatprep.subr.mxu0 0.0
  %389 = vmatpush1.msra.mxu0 %v83
  %390 = vmatprep.subr.mxu0 0.0
  %391 = vmatpush1.msra.mxu0 %v82
  %392 = vmatprep.subr.mxu0 0.0
  %393 = vmatpush1.msra.mxu0 %v81
  %394 = vmatprep.subr.mxu0 0.0
  %395 = vmatpush1.msra.mxu0 %v80
  %396 = vmatprep.subr.mxu0 0.0
  %397 = vmatpush1.msra.mxu0 %v79
  %398 = vmatprep.subr.mxu0 0.0
  %399 = vmatpush1.msra.mxu0 %v78
  %400 = vmatprep.subr.mxu0 0.0
  %401 = vmatpush1.msra.mxu0 %v77
  %402 = vmatprep.subr.mxu0 0.0
  %403 = vmatpush1.msra.mxu0 %v76
  %404 = vmatprep.subr.mxu0 0.0
  %405 = vmatpush1.msra.mxu0 %v75
  %406 = vmatprep.subr.mxu0 0.0
  %407 = vmatpush2.msra.mxu0 %v106
  %408 = vmatprep.subr.mxu0 0.0
  %409 = vmatpush2.msra.mxu0 %v105
  %410 = vmatprep.subr.mxu0 0.0
  %411 = vmatpush2.msra.mxu0 %v104
  %412 = vmatprep.subr.mxu0 0.0
  %413 = vmatpush2.msra.mxu0 %v103
  %414 = vmatprep.subr.mxu0 0.0
  %415 = vmatpush2.msra.mxu0 %v102
  %416 = vmatprep.subr.mxu0 0.0
  %417 = vmatpush2.msra.mxu0 %v101
  %418 = vmatprep.subr.mxu0 0.0
  %419 = vmatpush2.msra.mxu0 %v100
  %420 = vmatprep.subr.mxu0 0.0
  %421 = vmatpush2.msra.mxu0 %v99
  %422 = vmatprep.subr.mxu0 0.0
  %423 = vmatpush2.msra.mxu0 %v98
  %424 = vmatprep.subr.mxu0 0.0
  %425 = vmatpush2.msra.mxu0 %v97
  %426 = vmatprep.subr.mxu0 0.0
  %427 = vmatpush2.msra.mxu0 %v96
  %428 = vmatprep.subr.mxu0 0.0
  %429 = vmatpush2.msra.mxu0 %v95
  %430 = vmatprep.subr.mxu0 0.0
  %431 = vmatpush2.msra.mxu0 %v94
  %432 = vmatprep.subr.mxu0 0.0
  %433 = vmatpush2.msra.mxu0 %v93
  %434 = vmatprep.subr.mxu0 0.0
  %435 = vmatpush2.msra.mxu0 %v92
  %436 = vmatprep.subr.mxu0 0.0
  %437 = vmatpush2.msra.mxu0 %v91
  %438 = vmatprep.mubr.f32.mxu0 %v14
  %439 = vmatmul.mubr.f32.gmra.mxu0 %v13
  %v440 = vpop.f32.mrf.mxu0
  %v441 = vadd.f32 %v366, %v440
  %v442 = vpop.f32.mrf.mxu0
  %443 = vmatprep.mubr.f32.mxu0 %v30
  %444 = vmatmul.mubr.f32.gmra.mxu0 %v29
  %v445 = vpop.f32.mrf.mxu0
  %v446 = vadd.f32 %v371, %v445
  %v447 = vpop.f32.mrf.mxu0
  %448 = vdwg.mxu0
  %449 = vmatprep.subr.mxu0 0.0
  %450 = vmatpush1.msra.mxu0 %v122
  %451 = vmatprep.subr.mxu0 0.0
  %452 = vmatpush1.msra.mxu0 %v121
  %453 = vmatprep.subr.mxu0 0.0
  %454 = vmatpush1.msra.mxu0 %v120
  %455 = vmatprep.subr.mxu0 0.0
  %456 = vmatpush1.msra.mxu0 %v119
  %457 = vmatprep.subr.mxu0 0.0
  %458 = vmatpush1.msra.mxu0 %v118
  %459 = vmatprep.subr.mxu0 0.0
  %460 = vmatpush1.msra.mxu0 %v117
  %461 = vmatprep.subr.mxu0 0.0
  %462 = vmatpush1.msra.mxu0 %v116
  %463 = vmatprep.subr.mxu0 0.0
  %464 = vmatpush1.msra.mxu0 %v115
  %465 = vmatprep.subr.mxu0 0.0
  %466 = vmatpush1.msra.mxu0 %v114
  %467 = vmatprep.subr.mxu0 0.0
  %468 = vmatpush1.msra.mxu0 %v113
  %469 = vmatprep.subr.mxu0 0.0
  %470 = vmatpush1.msra.mxu0 %v112
  %471 = vmatprep.subr.mxu0 0.0
  %472 = vmatpush1.msra.mxu0 %v111
  %473 = vmatprep.subr.mxu0 0.0
  %474 = vmatpush1.msra.mxu0 %v110
  %475 = vmatprep.subr.mxu0 0.0
  %476 = vmatpush1.msra.mxu0 %v109
  %477 = vmatprep.subr.mxu0 0.0
  %478 = vmatpush1.msra.mxu0 %v108
  %479 = vmatprep.subr.mxu0 0.0
  %480 = vmatpush1.msra.mxu0 %v107
  %481 = vmatprep.subr.mxu0 0.0
  %482 = vmatpush2.msra.mxu0 %v138
  %483 = vmatprep.subr.mxu0 0.0
  %484 = vmatpush2.msra.mxu0 %v137
  %485 = vmatprep.subr.mxu0 0.0
  %486 = vmatpush2.msra.mxu0 %v136
  %487 = vmatprep.subr.mxu0 0.0
  %488 = vmatpush2.msra.mxu0 %v135
  %489 = vmatprep.subr.mxu0 0.0
  %490 = vmatpush2.msra.mxu0 %v134
  %491 = vmatprep.subr.mxu0 0.0
  %492 = vmatpush2.msra.mxu0 %v133
  %493 = vmatprep.subr.mxu0 0.0
  %494 = vmatpush2.msra.mxu0 %v132
  %495 = vmatprep.subr.mxu0 0.0
  %496 = vmatpush2.msra.mxu0 %v131
  %497 = vmatprep.subr.mxu0 0.0
  %498 = vmatpush2.msra.mxu0 %v130
  %499 = vmatprep.subr.mxu0 0.0
  %500 = vmatpush2.msra.mxu0 %v129
  %501 = vmatprep.subr.mxu0 0.0
  %502 = vmatpush2.msra.mxu0 %v128
  %503 = vmatprep.subr.mxu0 0.0
  %504 = vmatpush2.msra.mxu0 %v127
  %505 = vmatprep.subr.mxu0 0.0
  %506 = vmatpush2.msra.mxu0 %v126
  %507 = vmatprep.subr.mxu0 0.0
  %508 = vmatpush2.msra.mxu0 %v125
  %509 = vmatprep.subr.mxu0 0.0
  %510 = vmatpush2.msra.mxu0 %v124
  %511 = vmatprep.subr.mxu0 0.0
  %512 = vmatpush2.msra.mxu0 %v123
  %513 = vmatprep.mubr.f32.mxu0 %v16
  %514 = vmatmul.mubr.f32.gmra.mxu0 %v15
  %v515 = vpop.f32.mrf.mxu0
  %v516 = vadd.f32 %v441, %v515
  %v517 = vpop.f32.mrf.mxu0
  %518 = vmatprep.mubr.f32.mxu0 %v32
  %519 = vmatmul.mubr.f32.gmra.mxu0 %v31
  %v520 = vpop.f32.mrf.mxu0
  %v521 = vadd.f32 %v446, %v520
  %v522 = vpop.f32.mrf.mxu0
  %523 = vdwg.mxu0
  %524 = vmatprep.subr.mxu0 0.0
  %525 = vmatpush1.msra.mxu0 %v154
  %526 = vmatprep.subr.mxu0 0.0
  %527 = vmatpush1.msra.mxu0 %v153
  %528 = vmatprep.subr.mxu0 0.0
  %529 = vmatpush1.msra.mxu0 %v152
  %530 = vmatprep.subr.mxu0 0.0
  %531 = vmatpush1.msra.mxu0 %v151
  %532 = vmatprep.subr.mxu0 0.0
  %533 = vmatpush1.msra.mxu0 %v150
  %534 = vmatprep.subr.mxu0 0.0
  %535 = vmatpush1.msra.mxu0 %v149
  %536 = vmatprep.subr.mxu0 0.0
  %537 = vmatpush1.msra.mxu0 %v148
  %538 = vmatprep.subr.mxu0 0.0
  %539 = vmatpush1.msra.mxu0 %v147
  %540 = vmatprep.subr.mxu0 0.0
  %541 = vmatpush1.msra.mxu0 %v146
  %542 = vmatprep.subr.mxu0 0.0
  %543 = vmatpush1.msra.mxu0 %v145
  %544 = vmatprep.subr.mxu0 0.0
  %545 = vmatpush1.msra.mxu0 %v144
  %546 = vmatprep.subr.mxu0 0.0
  %547 = vmatpush1.msra.mxu0 %v143
  %548 = vmatprep.subr.mxu0 0.0
  %549 = vmatpush1.msra.mxu0 %v142
  %550 = vmatprep.subr.mxu0 0.0
  %551 = vmatpush1.msra.mxu0 %v141
  %552 = vmatprep.subr.mxu0 0.0
  %553 = vmatpush1.msra.mxu0 %v140
  %554 = vmatprep.subr.mxu0 0.0
  %555 = vmatpush1.msra.mxu0 %v139
  %556 = vmatprep.subr.mxu0 0.0
  %557 = vmatpush2.msra.mxu0 %v170
  %558 = vmatprep.subr.mxu0 0.0
  %559 = vmatpush2.msra.mxu0 %v169
  %560 = vmatprep.subr.mxu0 0.0
  %561 = vmatpush2.msra.mxu0 %v168
  %562 = vmatprep.subr.mxu0 0.0
  %563 = vmatpush2.msra.mxu0 %v167
  %564 = vmatprep.subr.mxu0 0.0
  %565 = vmatpush2.msra.mxu0 %v166
  %566 = vmatprep.subr.mxu0 0.0
  %567 = vmatpush2.msra.mxu0 %v165
  %568 = vmatprep.subr.mxu0 0.0
  %569 = vmatpush2.msra.mxu0 %v164
  %570 = vmatprep.subr.mxu0 0.0
  %571 = vmatpush2.msra.mxu0 %v163
  %572 = vmatprep.subr.mxu0 0.0
  %573 = vmatpush2.msra.mxu0 %v162
  %574 = vmatprep.subr.mxu0 0.0
  %575 = vmatpush2.msra.mxu0 %v161
  %576 = vmatprep.subr.mxu0 0.0
  %577 = vmatpush2.msra.mxu0 %v160
  %578 = vmatprep.subr.mxu0 0.0
  %579 = vmatpush2.msra.mxu0 %v159
  %580 = vmatprep.subr.mxu0 0.0
  %581 = vmatpush2.msra.mxu0 %v158
  %582 = vmatprep.subr.mxu0 0.0
  %583 = vmatpush2.msra.mxu0 %v157
  %584 = vmatprep.subr.mxu0 0.0
  %585 = vmatpush2.msra.mxu0 %v156
  %586 = vmatprep.subr.mxu0 0.0
  %587 = vmatpush2.msra.mxu0 %v155
  %588 = vmatprep.mubr.f32.mxu0 %v18
  %589 = vmatmul.mubr.f32.gmra.mxu0 %v17
  %v590 = vpop.f32.mrf.mxu0
  %v591 = vadd.f32 %v516, %v590
  %v592 = vpop.f32.mrf.mxu0
  %593 = vmatprep.mubr.f32.mxu0 %v34
  %594 = vmatmul.mubr.f32.gmra.mxu0 %v33
  %v595 = vpop.f32.mrf.mxu0
  %v596 = vadd.f32 %v521, %v595
  %v597 = vpop.f32.mrf.mxu0
  %598 = vdwg.mxu0
  %599 = vmatprep.subr.mxu0 0.0
  %600 = vmatpush1.msra.mxu0 %v186
  %601 = vmatprep.subr.mxu0 0.0
  %602 = vmatpush1.msra.mxu0 %v185
  %603 = vmatprep.subr.mxu0 0.0
  %604 = vmatpush1.msra.mxu0 %v184
  %605 = vmatprep.subr.mxu0 0.0
  %606 = vmatpush1.msra.mxu0 %v183
  %607 = vmatprep.subr.mxu0 0.0
  %608 = vmatpush1.msra.mxu0 %v182
  %609 = vmatprep.subr.mxu0 0.0
  %610 = vmatpush1.msra.mxu0 %v181
  %611 = vmatprep.subr.mxu0 0.0
  %612 = vmatpush1.msra.mxu0 %v180
  %613 = vmatprep.subr.mxu0 0.0
  %614 = vmatpush1.msra.mxu0 %v179
  %615 = vmatprep.subr.mxu0 0.0
  %616 = vmatpush1.msra.mxu0 %v178
  %617 = vmatprep.subr.mxu0 0.0
  %618 = vmatpush1.msra.mxu0 %v177
  %619 = vmatprep.subr.mxu0 0.0
  %620 = vmatpush1.msra.mxu0 %v176
  %621 = vmatprep.subr.mxu0 0.0
  %622 = vmatpush1.msra.mxu0 %v175
  %623 = vmatprep.subr.mxu0 0.0
  %624 = vmatpush1.msra.mxu0 %v174
  %625 = vmatprep.subr.mxu0 0.0
  %626 = vmatpush1.msra.mxu0 %v173
  %627 = vmatprep.subr.mxu0 0.0
  %628 = vmatpush1.msra.mxu0 %v172
  %629 = vmatprep.subr.mxu0 0.0
  %630 = vmatpush1.msra.mxu0 %v171
  %631 = vmatprep.subr.mxu0 0.0
  %632 = vmatpush2.msra.mxu0 %v202
  %633 = vmatprep.subr.mxu0 0.0
  %634 = vmatpush2.msra.mxu0 %v201
  %635 = vmatprep.subr.mxu0 0.0
  %636 = vmatpush2.msra.mxu0 %v200
  %637 = vmatprep.subr.mxu0 0.0
  %638 = vmatpush2.msra.mxu0 %v199
  %639 = vmatprep.subr.mxu0 0.0
  %640 = vmatpush2.msra.mxu0 %v198
  %641 = vmatprep.subr.mxu0 0.0
  %642 = vmatpush2.msra.mxu0 %v197
  %643 = vmatprep.subr.mxu0 0.0
  %644 = vmatpush2.msra.mxu0 %v196
  %645 = vmatprep.subr.mxu0 0.0
  %646 = vmatpush2.msra.mxu0 %v195
  %647 = vmatprep.subr.mxu0 0.0
  %648 = vmatpush2.msra.mxu0 %v194
  %649 = vmatprep.subr.mxu0 0.0
  %650 = vmatpush2.msra.mxu0 %v193
  %651 = vmatprep.subr.mxu0 0.0
  %652 = vmatpush2.msra.mxu0 %v192
  %653 = vmatprep.subr.mxu0 0.0
  %654 = vmatpush2.msra.mxu0 %v191
  %655 = vmatprep.subr.mxu0 0.0
  %656 = vmatpush2.msra.mxu0 %v190
  %657 = vmatprep.subr.mxu0 0.0
  %658 = vmatpush2.msra.mxu0 %v189
  %659 = vmatprep.subr.mxu0 0.0
  %660 = vmatpush2.msra.mxu0 %v188
  %661 = vmatprep.subr.mxu0 0.0
  %662 = vmatpush2.msra.mxu0 %v187
  %663 = vmatprep.mubr.f32.mxu0 %v20
  %664 = vmatmul.mubr.f32.gmra.mxu0 %v19
  %v665 = vpop.f32.mrf.mxu0
  %v666 = vadd.f32 %v591, %v665
  %v667 = vpop.f32.mrf.mxu0
  %668 = vmatprep.mubr.f32.mxu0 %v36
  %669 = vmatmul.mubr.f32.gmra.mxu0 %v35
  %v670 = vpop.f32.mrf.mxu0
  %v671 = vadd.f32 %v596, %v670
  %v672 = vpop.f32.mrf.mxu0
  %673 = vdwg.mxu0
  %674 = vmatprep.subr.mxu0 0.0
  %675 = vmatpush1.msra.mxu0 %v218
  %676 = vmatprep.subr.mxu0 0.0
  %677 = vmatpush1.msra.mxu0 %v217
  %678 = vmatprep.subr.mxu0 0.0
  %679 = vmatpush1.msra.mxu0 %v216
  %680 = vmatprep.subr.mxu0 0.0
  %681 = vmatpush1.msra.mxu0 %v215
  %682 = vmatprep.subr.mxu0 0.0
  %683 = vmatpush1.msra.mxu0 %v214
  %684 = vmatprep.subr.mxu0 0.0
  %685 = vmatpush1.msra.mxu0 %v213
  %686 = vmatprep.subr.mxu0 0.0
  %687 = vmatpush1.msra.mxu0 %v212
  %688 = vmatprep.subr.mxu0 0.0
  %689 = vmatpush1.msra.mxu0 %v211
  %690 = vmatprep.subr.mxu0 0.0
  %691 = vmatpush1.msra.mxu0 %v210
  %692 = vmatprep.subr.mxu0 0.0
  %693 = vmatpush1.msra.mxu0 %v209
  %694 = vmatprep.subr.mxu0 0.0
  %695 = vmatpush1.msra.mxu0 %v208
  %696 = vmatprep.subr.mxu0 0.0
  %697 = vmatpush1.msra.mxu0 %v207
  %698 = vmatprep.subr.mxu0 0.0
  %699 = vmatpush1.msra.mxu0 %v206
  %700 = vmatprep.subr.mxu0 0.0
  %701 = vmatpush1.msra.mxu0 %v205
  %702 = vmatprep.subr.mxu0 0.0
  %703 = vmatpush1.msra.mxu0 %v204
  %704 = vmatprep.subr.mxu0 0.0
  %705 = vmatpush1.msra.mxu0 %v203
  %706 = vmatprep.subr.mxu0 0.0
  %707 = vmatpush2.msra.mxu0 %v234
  %708 = vmatprep.subr.mxu0 0.0
  %709 = vmatpush2.msra.mxu0 %v233
  %710 = vmatprep.subr.mxu0 0.0
  %711 = vmatpush2.msra.mxu0 %v232
  %712 = vmatprep.subr.mxu0 0.0
  %713 = vmatpush2.msra.mxu0 %v231
  %714 = vmatprep.subr.mxu0 0.0
  %715 = vmatpush2.msra.mxu0 %v230
  %716 = vmatprep.subr.mxu0 0.0
  %717 = vmatpush2.msra.mxu0 %v229
  %718 = vmatprep.subr.mxu0 0.0
  %719 = vmatpush2.msra.mxu0 %v228
  %720 = vmatprep.subr.mxu0 0.0
  %721 = vmatpush2.msra.mxu0 %v227
  %722 = vmatprep.subr.mxu0 0.0
  %723 = vmatpush2.msra.mxu0 %v226
  %724 = vmatprep.subr.mxu0 0.0
  %725 = vmatpush2.msra.mxu0 %v225
  %726 = vmatprep.subr.mxu0 0.0
  %727 = vmatpush2.msra.mxu0 %v224
  %728 = vmatprep.subr.mxu0 0.0
  %729 = vmatpush2.msra.mxu0 %v223
  %730 = vmatprep.subr.mxu0 0.0
  %731 = vmatpush2.msra.mxu0 %v222
  %732 = vmatprep.subr.mxu0 0.0
  %733 = vmatpush2.msra.mxu0 %v221
  %734 = vmatprep.subr.mxu0 0.0
  %735 = vmatpush2.msra.mxu0 %v220
  %736 = vmatprep.subr.mxu0 0.0
  %737 = vmatpush2.msra.mxu0 %v219
  %738 = vmatprep.mubr.f32.mxu0 %v22
  %739 = vmatmul.mubr.f32.gmra.mxu0 %v21
  %v740 = vpop.f32.mrf.mxu0
  %v741 = vadd.f32 %v666, %v740
  %v742 = vpop.f32.mrf.mxu0
  %743 = vmatprep.mubr.f32.mxu0 %v38
  %744 = vmatmul.mubr.f32.gmra.mxu0 %v37
  %v745 = vpop.f32.mrf.mxu0
  %v746 = vadd.f32 %v671, %v745
  %v747 = vpop.f32.mrf.mxu0
  %748 = vdwg.mxu0
  %749 = vmatprep.subr.mxu0 0.0
  %750 = vmatpush1.msra.mxu0 %v250
  %751 = vmatprep.subr.mxu0 0.0
  %752 = vmatpush1.msra.mxu0 %v249
  %753 = vmatprep.subr.mxu0 0.0
  %754 = vmatpush1.msra.mxu0 %v248
  %755 = vmatprep.subr.mxu0 0.0
  %756 = vmatpush1.msra.mxu0 %v247
  %757 = vmatprep.subr.mxu0 0.0
  %758 = vmatpush1.msra.mxu0 %v246
  %759 = vmatprep.subr.mxu0 0.0
  %760 = vmatpush1.msra.mxu0 %v245
  %761 = vmatprep.subr.mxu0 0.0
  %762 = vmatpush1.msra.mxu0 %v244
  %763 = vmatprep.subr.mxu0 0.0
  %764 = vmatpush1.msra.mxu0 %v243
  %765 = vmatprep.subr.mxu0 0.0
  %766 = vmatpush1.msra.mxu0 %v242
  %767 = vmatprep.subr.mxu0 0.0
  %768 = vmatpush1.msra.mxu0 %v241
  %769 = vmatprep.subr.mxu0 0.0
  %770 = vmatpush1.msra.mxu0 %v240
  %771 = vmatprep.subr.mxu0 0.0
  %772 = vmatpush1.msra.mxu0 %v239
  %773 = vmatprep.subr.mxu0 0.0
  %774 = vmatpush1.msra.mxu0 %v238
  %775 = vmatprep.subr.mxu0 0.0
  %776 = vmatpush1.msra.mxu0 %v237
  %777 = vmatprep.subr.mxu0 0.0
  %778 = vmatpush1.msra.mxu0 %v236
  %779 = vmatprep.subr.mxu0 0.0
  %780 = vmatpush1.msra.mxu0 %v235
  %781 = vmatprep.subr.mxu0 0.0
  %782 = vmatpush2.msra.mxu0 %v266
  %783 = vmatprep.subr.mxu0 0.0
  %784 = vmatpush2.msra.mxu0 %v265
  %785 = vmatprep.subr.mxu0 0.0
  %786 = vmatpush2.msra.mxu0 %v264
  %787 = vmatprep.subr.mxu0 0.0
  %788 = vmatpush2.msra.mxu0 %v263
  %789 = vmatprep.subr.mxu0 0.0
  %790 = vmatpush2.msra.mxu0 %v262
  %791 = vmatprep.subr.mxu0 0.0
  %792 = vmatpush2.msra.mxu0 %v261
  %793 = vmatprep.subr.mxu0 0.0
  %794 = vmatpush2.msra.mxu0 %v260
  %795 = vmatprep.subr.mxu0 0.0
  %796 = vmatpush2.msra.mxu0 %v259
  %797 = vmatprep.subr.mxu0 0.0
  %798 = vmatpush2.msra.mxu0 %v258
  %799 = vmatprep.subr.mxu0 0.0
  %800 = vmatpush2.msra.mxu0 %v257
  %801 = vmatprep.subr.mxu0 0.0
  %802 = vmatpush2.msra.mxu0 %v256
  %803 = vmatprep.subr.mxu0 0.0
  %804 = vmatpush2.msra.mxu0 %v255
  %805 = vmatprep.subr.mxu0 0.0
  %806 = vmatpush2.msra.mxu0 %v254
  %807 = vmatprep.subr.mxu0 0.0
  %808 = vmatpush2.msra.mxu0 %v253
  %809 = vmatprep.subr.mxu0 0.0
  %810 = vmatpush2.msra.mxu0 %v252
  %811 = vmatprep.subr.mxu0 0.0
  %812 = vmatpush2.msra.mxu0 %v251
  %813 = vmatprep.mubr.f32.mxu0 %v24
  %814 = vmatmul.mubr.f32.gmra.mxu0 %v23
  %v815 = vpop.f32.mrf.mxu0
  %v816 = vadd.f32 %v741, %v815
  %v817 = vpop.f32.mrf.mxu0
  %818 = vmatprep.mubr.f32.mxu0 %v40
  %819 = vmatmul.mubr.f32.gmra.mxu0 %v39
  %v820 = vpop.f32.mrf.mxu0
  %v821 = vadd.f32 %v746, %v820
  %v822 = vpop.f32.mrf.mxu0
  %823 = vdwg.mxu0
  %824 = vmatprep.subr.mxu0 0.0
  %825 = vmatpush1.msra.mxu0 %v282
  %826 = vmatprep.subr.mxu0 0.0
  %827 = vmatpush1.msra.mxu0 %v281
  %828 = vmatprep.subr.mxu0 0.0
  %829 = vmatpush1.msra.mxu0 %v280
  %830 = vmatprep.subr.mxu0 0.0
  %831 = vmatpush1.msra.mxu0 %v279
  %832 = vmatprep.subr.mxu0 0.0
  %833 = vmatpush1.msra.mxu0 %v278
  %834 = vmatprep.subr.mxu0 0.0
  %835 = vmatpush1.msra.mxu0 %v277
  %836 = vmatprep.subr.mxu0 0.0
  %837 = vmatpush1.msra.mxu0 %v276
  %838 = vmatprep.subr.mxu0 0.0
  %839 = vmatpush1.msra.mxu0 %v275
  %840 = vmatprep.subr.mxu0 0.0
  %841 = vmatpush1.msra.mxu0 %v274
  %842 = vmatprep.subr.mxu0 0.0
  %843 = vmatpush1.msra.mxu0 %v273
  %844 = vmatprep.subr.mxu0 0.0
  %845 = vmatpush1.msra.mxu0 %v272
  %846 = vmatprep.subr.mxu0 0.0
  %847 = vmatpush1.msra.mxu0 %v271
  %848 = vmatprep.subr.mxu0 0.0
  %849 = vmatpush1.msra.mxu0 %v270
  %850 = vmatprep.subr.mxu0 0.0
  %851 = vmatpush1.msra.mxu0 %v269
  %852 = vmatprep.subr.mxu0 0.0
  %853 = vmatpush1.msra.mxu0 %v268
  %854 = vmatprep.subr.mxu0 0.0
  %855 = vmatpush1.msra.mxu0 %v267
  %856 = vmatprep.subr.mxu0 0.0
  %857 = vmatpush2.msra.mxu0 %v298
  %858 = vmatprep.subr.mxu0 0.0
  %859 = vmatpush2.msra.mxu0 %v297
  %860 = vmatprep.subr.mxu0 0.0
  %861 = vmatpush2.msra.mxu0 %v296
  %862 = vmatprep.subr.mxu0 0.0
  %863 = vmatpush2.msra.mxu0 %v295
  %864 = vmatprep.subr.mxu0 0.0
  %865 = vmatpush2.msra.mxu0 %v294
  %866 = vmatprep.subr.mxu0 0.0
  %867 = vmatpush2.msra.mxu0 %v293
  %868 = vmatprep.subr.mxu0 0.0
  %869 = vmatpush2.msra.mxu0 %v292
  %870 = vmatprep.subr.mxu0 0.0
  %871 = vmatpush2.msra.mxu0 %v291
  %872 = vmatprep.subr.mxu0 0.0
  %873 = vmatpush2.msra.mxu0 %v290
  %874 = vmatprep.subr.mxu0 0.0
  %875 = vmatpush2.msra.mxu0 %v289
  %876 = vmatprep.subr.mxu0 0.0
  %877 = vmatpush2.msra.mxu0 %v288
  %878 = vmatprep.subr.mxu0 0.0
  %879 = vmatpush2.msra.mxu0 %v287
  %880 = vmatprep.subr.mxu0 0.0
  %881 = vmatpush2.msra.mxu0 %v286
  %882 = vmatprep.subr.mxu0 0.0
  %883 = vmatpush2.msra.mxu0 %v285
  %884 = vmatprep.subr.mxu0 0.0
  %885 = vmatpush2.msra.mxu0 %v284
  %886 = vmatprep.subr.mxu0 0.0
  %887 = vmatpush2.msra.mxu0 %v283
  %888 = vmatprep.mubr.f32.mxu0 %v26
  %889 = vmatmul.mubr.f32.gmra.mxu0 %v25
  %v890 = vpop.f32.mrf.mxu0
  %v891 = vadd.f32 %v816, %v890
  %v892 = vpop.f32.mrf.mxu0
  %893 = vmatprep.mubr.f32.mxu0 %v42
  %894 = vmatmul.mubr.f32.gmra.mxu0 %v41
  %v895 = vpop.f32.mrf.mxu0
  %v896 = vadd.f32 %v821, %v895
  %v897 = vpop.f32.mrf.mxu0
  %898 = vdwg.mxu0
  %vm899 = vcmask 31744
  %900 = vst.msk [vmem:[%s2] sm:$0xff] %vm899, %v891
  %901 = vst.msk [vmem:[%s2 + $0x8] sm:$0xff] %vm899, %v896
  // Predicated region
  $region10: #{tpu_custom_call.1} parent=0 // pred_check
    _
  $region11: #{tpu_custom_call.1} parent=0 // pred_check_branch
    %903 = sbr.rel (0) target = $region13
  $region12: #{tpu_custom_call.1} parent=0 // pred_region
    _
  $region13: #{tpu_custom_call.1} parent=0 // pred_fallthru
    _
  // Predicated region
  $region14: #{tpu_custom_call.1} parent=0 // pred_check
    _
  $region15: #{tpu_custom_call.1} parent=0 // pred_check_branch
    %905 = sbr.rel (0) target = $region17
  $region16: #{tpu_custom_call.1} parent=0 // pred_region
    _
  $region17: #{tpu_custom_call.1} parent=0 // pred_fallthru
    _

</llo_original>
